<compile_context>
chip_gen: v7x
topology: tpu7x:2x2x1
jax: 0.10.0
libtpu: 0.0.40
codegen_flags: <defaults>
</compile_context>

<pallas_src>
import functools

import jax
import jax.numpy as jnp
from jax import lax
from jax.experimental import pallas as pl
from jax.experimental.pallas import tpu as pltpu


def _task_repr_kernel(ids_ref, tbl_ref, b_ref, o_ref, *, seq_len, hist_dtype,
                      compare_in_hist):
    """One batch tile of the task-representation forward.

    ids_ref: (TB, S)   int32 token ids
    tbl_ref: (Vp, H)   fused (embedding @ W) / S table, compute dtype, resident
    b_ref:   (1, H)    projection bias, f32, resident
    o_ref:   (TB, H)   output task-representation tile, f32
    """
    tb = ids_ref.shape[0]
    vp = tbl_ref.shape[0]

    # Loop-invariant vocab iota (per-lane id).  When the histogram dtype can
    # represent every id exactly (bf16 -> Vp <= 256) compare in that dtype so
    # the compare works on half-width vregs.
    iota_i32 = lax.broadcasted_iota(jnp.int32, (tb, vp), 1)        # (TB, Vp)
    iota = iota_i32.astype(hist_dtype) if compare_in_hist else iota_i32

    # Per-row token-count histogram:  counts[b, v] = sum_s [ids[b, s] == v].
    # Unrolled over the small static sequence axis; one (TB, 1) ref slice per
    # step instead of materializing the whole (TB, S) block in vregs.
    counts = jnp.zeros((tb, vp), hist_dtype)
    for s in range(seq_len):
        col = ids_ref[:, s:s + 1]                                  # (TB, 1) int32
        if compare_in_hist:
            mask = col.astype(hist_dtype) == iota
        else:
            mask = col == iota
        counts = counts + mask.astype(hist_dtype)

    # Single fused matmul: counts @ ((E @ W) / S)  ==  mean_pool(E[ids]) @ W.
    # counts are small exact integers -> lossless cast to the MXU dtype.
    proj = jnp.dot(counts.astype(tbl_ref.dtype), tbl_ref[...],
                   preferred_element_type=jnp.float32)             # (TB, H)

    o_ref[...] = jnp.tanh(proj + b_ref[...]).astype(o_ref.dtype)


def _default_hist_dtype():
    """bf16 histogram on bf16-VALU chips (v6e/v7x), f32 elsewhere (v5e etc.)."""
    try:
        kind = jax.devices()[0].device_kind.lower()
    except Exception:  # pragma: no cover - defensive
        return jnp.float32
    if "v6" in kind or "v7" in kind or "7x" in kind:
        return jnp.bfloat16
    return jnp.float32


def task_repr_forward(token_ids, emb_table, w, b, *, tb=None,
                      compute_dtype=jnp.bfloat16, hist_dtype=None):
    """token_ids: (B, S) int32; emb_table: (V, D); w: (D, H); b: (H,)."""
    B, S = token_ids.shape
    V, D = emb_table.shape
    H = w.shape[1]

    if hist_dtype is None:
        hist_dtype = _default_hist_dtype()

    # --- Algebraic fold (done once, in f32, in the wrapper) -------------------
    # fused[v] = (emb_table[v] @ W) / S, so  counts @ fused == mean-pool @ W.
    fused = (emb_table.astype(jnp.float32) @ w.astype(jnp.float32)) * (1.0 / S)

    Vp = ((V + 127) // 128) * 128                  # lane-dense vocab padding
    fused_p = jnp.pad(fused, ((0, Vp - V), (0, 0))).astype(compute_dtype)

    # --- Batch tiling: keep >= 2-4 grid steps so DMA/compute overlap ----------
    if tb is None:
        tb = 128 if B >= 512 else 64
    tb = max(8, min(int(tb), ((B + 7) // 8) * 8))
    tb = (tb // 8) * 8
    Bp = ((B + tb - 1) // tb) * tb                 # pad batch so the grid covers it

    ids_p = jnp.pad(token_ids.astype(jnp.int32), ((0, Bp - B), (0, 0)))
    b2 = b.reshape(1, H).astype(jnp.float32)

    # bf16 compares are exact only while every id fits in bf16's 8-bit mantissa.
    compare_in_hist = (hist_dtype == jnp.bfloat16) and (Vp <= 256)

    kernel = functools.partial(_task_repr_kernel, seq_len=S,
                               hist_dtype=hist_dtype,
                               compare_in_hist=compare_in_hist)

    out = pl.pallas_call(
        kernel,
        out_shape=jax.ShapeDtypeStruct((Bp, H), jnp.float32),
        grid_spec=pltpu.PrefetchScalarGridSpec(
            num_scalar_prefetch=0,
            grid=(Bp // tb,),
            in_specs=[
                pl.BlockSpec((tb, S), lambda i: (i, 0)),    # token-id tile
                pl.BlockSpec((Vp, H), lambda i: (0, 0)),    # resident fused table
                pl.BlockSpec((1, H), lambda i: (0, 0)),     # resident bias
            ],
            out_specs=pl.BlockSpec((tb, H), lambda i: (i, 0)),  # lane-dense (H=128)
        ),
        compiler_params=pltpu.CompilerParams(
            dimension_semantics=("parallel",),     # batch axis: megacore-shardable
        ),
    )(ids_p, fused_p, b2)

    return out[:B]


def reference_forward(token_ids, emb_table, w, b):
    emb = emb_table[token_ids]                          # (B, S, D)
    pooled = jnp.mean(emb.astype(jnp.float32), axis=1)  # (B, D)
    return jnp.tanh(pooled @ w + b[None, :])            # (B, H)


if __name__ == "__main__":
    # Small per-item shapes; batch sized so the grid has 4 steps at tb=64
    # (pipelining per core even with megacore sharding).  Total work is tiny.
    B, S, D, H, V = 256, 8, 128, 128, 32

    key = jax.random.PRNGKey(0)
    k_ids, k_emb, k_w, k_b = jax.random.split(key, 4)

    token_ids = jax.random.randint(k_ids, (B, S), 0, V, dtype=jnp.int32)
    emb_table = jax.random.normal(k_emb, (V, D), dtype=jnp.float32) * 0.1
    w = jax.random.normal(k_w, (D, H), dtype=jnp.float32) * 0.05
    b = jax.random.normal(k_b, (H,), dtype=jnp.float32) * 0.01

    out = jax.block_until_ready(task_repr_forward(token_ids, emb_table, w, b))
    ref = reference_forward(token_ids, emb_table, w, b)

    assert out.shape == (B, H)
    # The fold is done in f32; only the single bf16 MXU matmul (with f32
    # accumulation) introduces error, so this tolerance is comfortable.
    assert jnp.allclose(out, ref, atol=2e-2, rtol=2e-2), "mismatch vs reference"

    print("KERNEL_OK")
</pallas_src>

<mosaic_0001>
module attributes {stable_mosaic.version = 11 : i64} {
  func.func @_task_repr_kernel(%arg0: i32, %arg1: memref<64x8xi32, #tpu.memory_space<vmem>>, %arg2: memref<128x128xbf16, #tpu.memory_space<vmem>>, %arg3: memref<1x128xf32, #tpu.memory_space<vmem>>, %arg4: memref<64x128xf32, #tpu.memory_space<vmem>>) attributes {dimension_semantics = [#tpu.dimension_semantics<parallel>], iteration_bounds = array<i64: 4>, scalar_prefetch = 0 : i64, scratch_operands = 0 : i64, tpu.core_type = #tpu.core_type<tc>, window_params = [{transform_indices = @transform_0, window_bounds = array<i64: 64, 8>}, {pipeline_mode = #tpu.pipeline_mode<synchronous>, transform_indices = @transform_1, window_bounds = array<i64: 128, 128>}, {pipeline_mode = #tpu.pipeline_mode<synchronous>, transform_indices = @transform_2, window_bounds = array<i64: 1, 128>}, {transform_indices = @transform_3, window_bounds = array<i64: 64, 128>}]} {
    %0 = tpu.iota {dimensions = array<i32: 1>} : vector<64x128xi32>
    %cst = arith.constant 0.000000e+00 : f32
    %1 = vector.broadcast %cst : f32 to vector<64x128xf32>
    %c0 = arith.constant 0 : index
    %c0_0 = arith.constant 0 : index
    %2 = vector.load %arg1[%c0, %c0_0] : memref<64x8xi32, #tpu.memory_space<vmem>>, vector<64x1xi32>
    %3 = vector.broadcast %2 : vector<64x1xi32> to vector<64x128xi32>
    %4 = arith.cmpi eq, %3, %0 : vector<64x128xi32>
    %5 = arith.extui %4 : vector<64x128xi1> to vector<64x128xi32>
    %6 = arith.sitofp %5 : vector<64x128xi32> to vector<64x128xf32>
    %7 = arith.addf %1, %6 : vector<64x128xf32>
    %c0_1 = arith.constant 0 : index
    %c1 = arith.constant 1 : index
    %8 = vector.load %arg1[%c0_1, %c1] : memref<64x8xi32, #tpu.memory_space<vmem>>, vector<64x1xi32>
    %9 = vector.broadcast %8 : vector<64x1xi32> to vector<64x128xi32>
    %10 = arith.cmpi eq, %9, %0 : vector<64x128xi32>
    %11 = arith.extui %10 : vector<64x128xi1> to vector<64x128xi32>
    %12 = arith.sitofp %11 : vector<64x128xi32> to vector<64x128xf32>
    %13 = arith.addf %7, %12 : vector<64x128xf32>
    %c0_2 = arith.constant 0 : index
    %c2 = arith.constant 2 : index
    %14 = vector.load %arg1[%c0_2, %c2] : memref<64x8xi32, #tpu.memory_space<vmem>>, vector<64x1xi32>
    %15 = vector.broadcast %14 : vector<64x1xi32> to vector<64x128xi32>
    %16 = arith.cmpi eq, %15, %0 : vector<64x128xi32>
    %17 = arith.extui %16 : vector<64x128xi1> to vector<64x128xi32>
    %18 = arith.sitofp %17 : vector<64x128xi32> to vector<64x128xf32>
    %19 = arith.addf %13, %18 : vector<64x128xf32>
    %c0_3 = arith.constant 0 : index
    %c3 = arith.constant 3 : index
    %20 = vector.load %arg1[%c0_3, %c3] : memref<64x8xi32, #tpu.memory_space<vmem>>, vector<64x1xi32>
    %21 = vector.broadcast %20 : vector<64x1xi32> to vector<64x128xi32>
    %22 = arith.cmpi eq, %21, %0 : vector<64x128xi32>
    %23 = arith.extui %22 : vector<64x128xi1> to vector<64x128xi32>
    %24 = arith.sitofp %23 : vector<64x128xi32> to vector<64x128xf32>
    %25 = arith.addf %19, %24 : vector<64x128xf32>
    %c0_4 = arith.constant 0 : index
    %c4 = arith.constant 4 : index
    %26 = vector.load %arg1[%c0_4, %c4] : memref<64x8xi32, #tpu.memory_space<vmem>>, vector<64x1xi32>
    %27 = vector.broadcast %26 : vector<64x1xi32> to vector<64x128xi32>
    %28 = arith.cmpi eq, %27, %0 : vector<64x128xi32>
    %29 = arith.extui %28 : vector<64x128xi1> to vector<64x128xi32>
    %30 = arith.sitofp %29 : vector<64x128xi32> to vector<64x128xf32>
    %31 = arith.addf %25, %30 : vector<64x128xf32>
    %c0_5 = arith.constant 0 : index
    %c5 = arith.constant 5 : index
    %32 = vector.load %arg1[%c0_5, %c5] : memref<64x8xi32, #tpu.memory_space<vmem>>, vector<64x1xi32>
    %33 = vector.broadcast %32 : vector<64x1xi32> to vector<64x128xi32>
    %34 = arith.cmpi eq, %33, %0 : vector<64x128xi32>
    %35 = arith.extui %34 : vector<64x128xi1> to vector<64x128xi32>
    %36 = arith.sitofp %35 : vector<64x128xi32> to vector<64x128xf32>
    %37 = arith.addf %31, %36 : vector<64x128xf32>
    %c0_6 = arith.constant 0 : index
    %c6 = arith.constant 6 : index
    %38 = vector.load %arg1[%c0_6, %c6] : memref<64x8xi32, #tpu.memory_space<vmem>>, vector<64x1xi32>
    %39 = vector.broadcast %38 : vector<64x1xi32> to vector<64x128xi32>
    %40 = arith.cmpi eq, %39, %0 : vector<64x128xi32>
    %41 = arith.extui %40 : vector<64x128xi1> to vector<64x128xi32>
    %42 = arith.sitofp %41 : vector<64x128xi32> to vector<64x128xf32>
    %43 = arith.addf %37, %42 : vector<64x128xf32>
    %c0_7 = arith.constant 0 : index
    %c7 = arith.constant 7 : index
    %44 = vector.load %arg1[%c0_7, %c7] : memref<64x8xi32, #tpu.memory_space<vmem>>, vector<64x1xi32>
    %45 = vector.broadcast %44 : vector<64x1xi32> to vector<64x128xi32>
    %46 = arith.cmpi eq, %45, %0 : vector<64x128xi32>
    %47 = arith.extui %46 : vector<64x128xi1> to vector<64x128xi32>
    %48 = arith.sitofp %47 : vector<64x128xi32> to vector<64x128xf32>
    %49 = arith.addf %43, %48 : vector<64x128xf32>
    %50 = arith.truncf %49 : vector<64x128xf32> to vector<64x128xbf16>
    %c0_8 = arith.constant 0 : index
    %c0_9 = arith.constant 0 : index
    %51 = vector.load %arg2[%c0_8, %c0_9] : memref<128x128xbf16, #tpu.memory_space<vmem>>, vector<128x128xbf16>
    %cst_10 = arith.constant dense<0.000000e+00> : vector<64x128xf32>
    %52 = tpu.matmul %50, %51, %cst_10 {dimension_numbers = #tpu.dot_dimension_numbers<[1], [0], [0], [1], [0, 0, 1, 1], [], []>} : vector<64x128xbf16>, vector<128x128xbf16>, vector<64x128xf32> -> vector<64x128xf32>
    %c0_11 = arith.constant 0 : index
    %c0_12 = arith.constant 0 : index
    %53 = vector.load %arg3[%c0_11, %c0_12] : memref<1x128xf32, #tpu.memory_space<vmem>>, vector<1x128xf32>
    %54 = vector.broadcast %53 : vector<1x128xf32> to vector<64x128xf32>
    %55 = arith.addf %52, %54 : vector<64x128xf32>
    %56 = math.tanh %55 : vector<64x128xf32>
    %c0_13 = arith.constant 0 : index
    %c0_14 = arith.constant 0 : index
    %57 = vector.load %arg4[%c0_13, %c0_14] : memref<64x128xf32, #tpu.memory_space<vmem>>, vector<64x128xf32>
    tpu.vector_store %arg4[%c0_13, %c0_14], %56 {strides = array<i32>} : memref<64x128xf32, #tpu.memory_space<vmem>>, vector<64x128xf32>,
    return
  }
  func.func @transform_0(%arg0: i32) -> (i32, i32) {
    %c0_i32 = arith.constant 0 : i32
    %c0_i32_0 = arith.constant 0 : i32
    return %arg0, %c0_i32 : i32, i32
  }
  func.func @transform_1(%arg0: i32) -> (i32, i32) {
    %c0_i32 = arith.constant 0 : i32
    %c0_i32_0 = arith.constant 0 : i32
    %c0_i32_1 = arith.constant 0 : i32
    return %c0_i32, %c0_i32_0 : i32, i32
  }
  func.func @transform_2(%arg0: i32) -> (i32, i32) {
    %c0_i32 = arith.constant 0 : i32
    %c0_i32_0 = arith.constant 0 : i32
    %c0_i32_1 = arith.constant 0 : i32
    return %c0_i32, %c0_i32_0 : i32, i32
  }
  func.func @transform_3(%arg0: i32) -> (i32, i32) {
    %c0_i32 = arith.constant 0 : i32
    %c0_i32_0 = arith.constant 0 : i32
    return %arg0, %c0_i32 : i32, i32
  }
}

</mosaic_0001>

<llo_original>
// kernel: tpu_custom_call.1
$region0: #{tpu_custom_call.1}
  #allocation0 [shape = 'u32[]', space=smem, size = 0x4, offset = 0x4, fixed_abs, tag = 'smem constant byte address 0x4 - core index']
  #allocation1 [shape = 'u32[144,128]{1,0:T(1,128)}', space=vmem, size = 0x12000, scoped, tag = 'internal scratch']
  %s0 = inlined_call_operand.vmem [shape: s32[256,8], index: 0, kind: input, shape index: {}]
  %s1 = inlined_call_operand.vmem [shape: bf16[128,128], index: 1, kind: input, shape index: {}]
  %s2 = inlined_call_operand.vmem [shape: f32[1,128], index: 2, kind: input, shape index: {}]
  %s3 = inlined_call_operand.hbm [shape: f32[256,128], index: 3, kind: output, shape index: {}]
  %s4 = sld [smem:[#allocation0]]
  $region45: #{tpu_custom_call.1} parent=0
    _
  %s6 = ssub.s32 1, %s4
  %s7 = scalar_select 0, %s6, %s4
  $region1: #{tpu_custom_call.1} parent=0
    #allocation2 [shape = 'u8[65536]{0}', space=vmem, size = 0x10000, scoped, tag = 'output window, operand 0']
    #allocation3 [shape = 's32[2]{0}', space=sflag, size = 0x8, scoped, tag = 'scoped memory for tpu_custom_call.1']
    %8 = vsyncpa [#allocation3], 0
    %s9 = scalar_lea.sflag [#allocation3], 1
    %10 = vsyncpa %s9, 0
    loop: start=0, step=1, limit=6
    $region2: #{tpu_custom_call.1} parent=1 // loop_pre_header
      _
    $region3: #{tpu_custom_call.1} parent=1 // loop_header
      %s12 = sphi 0, %s16
      %p13 = scmp.ge.s32.totalorder %s12, 6
      %s22 = sphi 0, %s24
      %s25 = sphi 0, %s22
      %s26 = sphi 0, %s25
      %s42 = sphi 0, %s26
      %s46 = sphi 0, %s46
      %s48 = sphi 0, %s46
      %s49 = sphi 0, %s48
      %s63 = sphi 0, %s49
      %s67 = sphi 0, %s67
      %s69 = sphi 0, %s67
      %s70 = sphi 0, %s69
      %s84 = sphi 0, %s70
      %s90 = sphi 0, %s92
      %s93 = sphi 0, %s90
      %s94 = sphi 0, %s93
      %s110 = sphi 0, %s94
    $region4: #{tpu_custom_call.1} parent=1 // loop_header_branch
      %15 = sbr.rel (%p13) target = $region8
    $region5: #{tpu_custom_call.1} parent=1 // loop_body
      %s17 = ssub.s32 %s12, 1
      %s18 = ssub.s32 %s12, 2
      %s19 = sadd.s32 %s12, 1
      %s20 = ssub.s32 %s12, %s19
      %p21 = scmp.eq.s32.totalorder %s20, 0
      %s23 = sadd.s32 %s22, 1
      %s24 = scalar_select %p21, %s22, %s23
      %p27 = pneg %p21
      %p28 = scmp.eq.s32.totalorder %s12, 3
      %p29 = por %p27, %p28
      %p30 = scmp.ne.s32.totalorder %s22, %s25
      %p31 = scmp.eq.s32.totalorder %s12, 0
      %p32 = por %p30, %p31
      %p33 = scmp.ne.s32.totalorder %s22, %s25
      %p34 = scmp.eq.s32.totalorder %s17, 3
      %p35 = por %p33, %p34
      %p36 = scmp.ne.s32.totalorder %s25, %s26
      %p37 = scmp.eq.s32.totalorder %s17, 0
      %p38 = por %p36, %p37
      %p39 = scmp.ne.s32.totalorder %s25, %s26
      %p40 = scmp.eq.s32.totalorder %s18, 3
      %p41 = por %p39, %p40
      %p43 = scmp.ne.s32.totalorder %s26, %s42
      %p44 = scmp.eq.s32.totalorder %s18, 0
      %p45 = por %p43, %p44
      %s47 = sadd.s32 %s46, 1
      %p50 = scmp.eq.s32.totalorder %s12, 3
      %p51 = scmp.ne.s32.totalorder %s46, %s48
      %p52 = scmp.eq.s32.totalorder %s12, 0
      %p53 = por %p51, %p52
      %p54 = scmp.ne.s32.totalorder %s46, %s48
      %p55 = scmp.eq.s32.totalorder %s17, 3
      %p56 = por %p54, %p55
      %p57 = scmp.ne.s32.totalorder %s48, %s49
      %p58 = scmp.eq.s32.totalorder %s17, 0
      %p59 = por %p57, %p58
      %p60 = scmp.ne.s32.totalorder %s48, %s49
      %p61 = scmp.eq.s32.totalorder %s18, 3
      %p62 = por %p60, %p61
      %p64 = scmp.ne.s32.totalorder %s49, %s63
      %p65 = scmp.eq.s32.totalorder %s18, 0
      %p66 = por %p64, %p65
      %s68 = sadd.s32 %s67, 1
      %p71 = scmp.eq.s32.totalorder %s12, 3
      %p72 = scmp.ne.s32.totalorder %s67, %s69
      %p73 = scmp.eq.s32.totalorder %s12, 0
      %p74 = por %p72, %p73
      %p75 = scmp.ne.s32.totalorder %s67, %s69
      %p76 = scmp.eq.s32.totalorder %s17, 3
      %p77 = por %p75, %p76
      %p78 = scmp.ne.s32.totalorder %s69, %s70
      %p79 = scmp.eq.s32.totalorder %s17, 0
      %p80 = por %p78, %p79
      %p81 = scmp.ne.s32.totalorder %s69, %s70
      %p82 = scmp.eq.s32.totalorder %s18, 3
      %p83 = por %p81, %p82
      %p85 = scmp.ne.s32.totalorder %s70, %s84
      %p86 = scmp.eq.s32.totalorder %s18, 0
      %p87 = por %p85, %p86
      %s88 = ssub.s32 %s12, %s19
      %p89 = scmp.eq.s32.totalorder %s88, 0
      %s91 = sadd.s32 %s90, 1
      %s92 = scalar_select %p89, %s90, %s91
      %p95 = pneg %p89
      %p96 = scmp.eq.s32.totalorder %s12, 3
      %p97 = por %p95, %p96
      %p98 = scmp.ne.s32.totalorder %s90, %s93
      %p99 = scmp.eq.s32.totalorder %s12, 0
      %p100 = por %p98, %p99
      %p101 = scmp.ne.s32.totalorder %s90, %s93
      %p102 = scmp.eq.s32.totalorder %s17, 3
      %p103 = por %p101, %p102
      %p104 = scmp.ne.s32.totalorder %s93, %s94
      %p105 = scmp.eq.s32.totalorder %s17, 0
      %p106 = por %p104, %p105
      %p107 = scmp.ne.s32.totalorder %s93, %s94
      %p108 = scmp.eq.s32.totalorder %s18, 3
      %p109 = por %p107, %p108
      %p111 = scmp.ne.s32.totalorder %s94, %s110
      %p112 = scmp.eq.s32.totalorder %s18, 0
      %p113 = por %p111, %p112
      %p114 = scmp.le.s32.totalorder 1, %s12
      %p115 = scmp.lt.s32.totalorder %s12, 5
      %p116 = pnand %p114, %p115
      %p117 = pneg %p116
      // Predicated region
      $region9: #{tpu_custom_call.1} parent=5 // pred_check
        _
      $region10: #{tpu_custom_call.1} parent=5 // pred_check_branch
        %119 = sbr.rel (%p116) target = $region12
      $region11: #{tpu_custom_call.1} parent=5 // pred_region
        %s120 = ssub.s32 %s12, 1
        // Predicated region
        $region13: #{tpu_custom_call.1} parent=11 // pred_check
          %p121 = pneg %p59
        $region14: #{tpu_custom_call.1} parent=11 // pred_check_branch
          %123 = sbr.rel (%p121) target = $region16
        $region15: #{tpu_custom_call.1} parent=11 // pred_region
          _
        $region16: #{tpu_custom_call.1} parent=11 // pred_fallthru
          _
        // Predicated region
        $region17: #{tpu_custom_call.1} parent=11 // pred_check
          %p124 = pneg %p80
        $region18: #{tpu_custom_call.1} parent=11 // pred_check_branch
          %126 = sbr.rel (%p124) target = $region20
        $region19: #{tpu_custom_call.1} parent=11 // pred_region
          _
        $region20: #{tpu_custom_call.1} parent=11 // pred_fallthru
          _
      $region12: #{tpu_custom_call.1} parent=5 // pred_fallthru
        _
      %p127 = scmp.lt.s32.totalorder %s12, 4
      // Predicated region
      $region21: #{tpu_custom_call.1} parent=5 // pred_check
        %p128 = pneg %p127
      $region22: #{tpu_custom_call.1} parent=5 // pred_check_branch
        %130 = sbr.rel (%p128) target = $region24
      $region23: #{tpu_custom_call.1} parent=5 // pred_region
        // Predicated region
        $region25: #{tpu_custom_call.1} parent=23 // pred_check
          %p131 = pneg %p32
        $region26: #{tpu_custom_call.1} parent=23 // pred_check_branch
          %133 = sbr.rel (%p131) target = $region28
        $region27: #{tpu_custom_call.1} parent=23 // pred_region
          %s134 = smul.u32 8, %s12
          %p135 = scmp.lt.s32.totalorder %s134, 31
          %s136 = scalar_select %p135, %s134, 31
          %s137 = smul.addr %s136, 8
          %s138 = scalar_lea.vmem %s0, %s137
          %s139 = smul.u32 8, %s12
        $region28: #{tpu_custom_call.1} parent=23 // pred_fallthru
          _
      $region24: #{tpu_custom_call.1} parent=5 // pred_fallthru
        _
      %p140 = scmp.le.s32.totalorder 1, %s12
      %p141 = scmp.lt.s32.totalorder %s12, 5
      %p142 = pnand %p140, %p141
      %p143 = pneg %p142
      // Predicated region
      $region29: #{tpu_custom_call.1} parent=5 // pred_check
        _
      $region30: #{tpu_custom_call.1} parent=5 // pred_check_branch
        %145 = sbr.rel (%p142) target = $region32
      $region31: #{tpu_custom_call.1} parent=5 // pred_region
        %s146 = ssub.s32 %s12, 1
        %s147 = smul.u32 8, %s17
        %p148 = scmp.lt.s32.totalorder %s147, 31
        %s149 = scalar_select %p148, %s147, 31
        %s150 = smul.addr %s149, 8
        %s151 = scalar_lea.vmem %s0, %s150
        %p152 = pneg %p38
        %p153 = pneg %p35
        %p154 = pneg %p59
        %p155 = pneg %p56
        %p156 = pneg %p80
        %p157 = pneg %p77
        %p158 = pneg %p106
        %p159 = pneg %p103
        %s160 = sand.u32 %s93, 1
        %s161 = scalar_lea.sflag [#allocation3], %s160
        %s162 = sand.u32 %s93, 1
        %s163 = smul.addr %s162, 64
        %s164 = scalar_lea.vmem [#allocation2], %s163
        %s165 = smul.u32 8, %s17
        %p166 = scmp.lt.s32.totalorder %s165, 31
        %s167 = scalar_select %p166, %s165, 31
        %s168 = smul.addr %s167, 8
        %s169 = scalar_lea.vmem %s0, %s168
        %s170 = smul.u32 8, %s17
        %s171 = smul.u32 8, %s17
        %v173 = vlaneseq
        %v174 = vand.u32 %v173, 127
        %v175 = vld [vmem:[%s169] sm:$0xff]
        %v176 = vld [vmem:[%s169 + $0x8] sm:$0xff]
        %v177 = vld [vmem:[%s169 + $0x10] sm:$0xff]
        %v178 = vld [vmem:[%s169 + $0x18] sm:$0xff]
        %v179 = vld [vmem:[%s169 + $0x20] sm:$0xff]
        %v180 = vld [vmem:[%s169 + $0x28] sm:$0xff]
        %v181 = vld [vmem:[%s169 + $0x30] sm:$0xff]
        %v182 = vld [vmem:[%s169 + $0x38] sm:$0xff]
        %183 = vset.pattern.permute.xlu0 0
        %184 = vperm.xlu0 %183, %v175
        %v185 = vpop.permute.xlu0 %184
        %186 = vset.pattern.permute.xlu0 0
        %187 = vperm.xlu0 %186, %v176
        %v188 = vpop.permute.xlu0 %187
        %189 = vset.pattern.permute.xlu0 0
        %190 = vperm.xlu0 %189, %v177
        %v191 = vpop.permute.xlu0 %190
        %192 = vset.pattern.permute.xlu0 0
        %193 = vperm.xlu0 %192, %v178
        %v194 = vpop.permute.xlu0 %193
        %195 = vset.pattern.permute.xlu0 0
        %196 = vperm.xlu0 %195, %v179
        %v197 = vpop.permute.xlu0 %196
        %198 = vset.pattern.permute.xlu0 0
        %199 = vperm.xlu0 %198, %v180
        %v200 = vpop.permute.xlu0 %199
        %201 = vset.pattern.permute.xlu0 0
        %202 = vperm.xlu0 %201, %v181
        %v203 = vpop.permute.xlu0 %202
        %204 = vset.pattern.permute.xlu0 0
        %205 = vperm.xlu0 %204, %v182
        %v206 = vpop.permute.xlu0 %205
        %vm207 = vcmp.eq.s32.totalorder %v185, %v174
        %vm208 = vcmp.eq.s32.totalorder %v188, %v174
        %vm209 = vcmp.eq.s32.totalorder %v191, %v174
        %vm210 = vcmp.eq.s32.totalorder %v194, %v174
        %vm211 = vcmp.eq.s32.totalorder %v197, %v174
        %vm212 = vcmp.eq.s32.totalorder %v200, %v174
        %vm213 = vcmp.eq.s32.totalorder %v203, %v174
        %vm214 = vcmp.eq.s32.totalorder %v206, %v174
        %v215 = vsel %vm207, 1, 0
        %v216 = vsel %vm208, 1, 0
        %v217 = vsel %vm209, 1, 0
        %v218 = vsel %vm210, 1, 0
        %v219 = vsel %vm211, 1, 0
        %v220 = vsel %vm212, 1, 0
        %v221 = vsel %vm213, 1, 0
        %v222 = vsel %vm214, 1, 0
        %v223 = vcvt.s32.f32 %v215
        %v224 = vcvt.s32.f32 %v216
        %v225 = vcvt.s32.f32 %v217
        %v226 = vcvt.s32.f32 %v218
        %v227 = vcvt.s32.f32 %v219
        %v228 = vcvt.s32.f32 %v220
        %v229 = vcvt.s32.f32 %v221
        %v230 = vcvt.s32.f32 %v222
        %v231 = vadd.f32 %v223, 0.0
        %v232 = vadd.f32 %v224, 0.0
        %v233 = vadd.f32 %v225, 0.0
        %v234 = vadd.f32 %v226, 0.0
        %v235 = vadd.f32 %v227, 0.0
        %v236 = vadd.f32 %v228, 0.0
        %v237 = vadd.f32 %v229, 0.0
        %v238 = vadd.f32 %v230, 0.0
        %239 = vset.pattern.permute.xlu0 1
        %240 = vperm.xlu0 %239, %v175
        %v241 = vpop.permute.xlu0 %240
        %242 = vset.pattern.permute.xlu0 1
        %243 = vperm.xlu0 %242, %v176
        %v244 = vpop.permute.xlu0 %243
        %245 = vset.pattern.permute.xlu0 1
        %246 = vperm.xlu0 %245, %v177
        %v247 = vpop.permute.xlu0 %246
        %248 = vset.pattern.permute.xlu0 1
        %249 = vperm.xlu0 %248, %v178
        %v250 = vpop.permute.xlu0 %249
        %251 = vset.pattern.permute.xlu0 1
        %252 = vperm.xlu0 %251, %v179
        %v253 = vpop.permute.xlu0 %252
        %254 = vset.pattern.permute.xlu0 1
        %255 = vperm.xlu0 %254, %v180
        %v256 = vpop.permute.xlu0 %255
        %257 = vset.pattern.permute.xlu0 1
        %258 = vperm.xlu0 %257, %v181
        %v259 = vpop.permute.xlu0 %258
        %260 = vset.pattern.permute.xlu0 1
        %261 = vperm.xlu0 %260, %v182
        %v262 = vpop.permute.xlu0 %261
        %vm263 = vcmp.eq.s32.totalorder %v241, %v174
        %vm264 = vcmp.eq.s32.totalorder %v244, %v174
        %vm265 = vcmp.eq.s32.totalorder %v247, %v174
        %vm266 = vcmp.eq.s32.totalorder %v250, %v174
        %vm267 = vcmp.eq.s32.totalorder %v253, %v174
        %vm268 = vcmp.eq.s32.totalorder %v256, %v174
        %vm269 = vcmp.eq.s32.totalorder %v259, %v174
        %vm270 = vcmp.eq.s32.totalorder %v262, %v174
        %v271 = vsel %vm263, 1, 0
        %v272 = vsel %vm264, 1, 0
        %v273 = vsel %vm265, 1, 0
        %v274 = vsel %vm266, 1, 0
        %v275 = vsel %vm267, 1, 0
        %v276 = vsel %vm268, 1, 0
        %v277 = vsel %vm269, 1, 0
        %v278 = vsel %vm270, 1, 0
        %v279 = vcvt.s32.f32 %v271
        %v280 = vcvt.s32.f32 %v272
        %v281 = vcvt.s32.f32 %v273
        %v282 = vcvt.s32.f32 %v274
        %v283 = vcvt.s32.f32 %v275
        %v284 = vcvt.s32.f32 %v276
        %v285 = vcvt.s32.f32 %v277
        %v286 = vcvt.s32.f32 %v278
        %v287 = vadd.f32 %v231, %v279
        %v288 = vadd.f32 %v232, %v280
        %v289 = vadd.f32 %v233, %v281
        %v290 = vadd.f32 %v234, %v282
        %v291 = vadd.f32 %v235, %v283
        %v292 = vadd.f32 %v236, %v284
        %v293 = vadd.f32 %v237, %v285
        %v294 = vadd.f32 %v238, %v286
        %295 = vset.pattern.permute.xlu0 2
        %296 = vperm.xlu0 %295, %v175
        %v297 = vpop.permute.xlu0 %296
        %298 = vset.pattern.permute.xlu0 2
        %299 = vperm.xlu0 %298, %v176
        %v300 = vpop.permute.xlu0 %299
        %301 = vset.pattern.permute.xlu0 2
        %302 = vperm.xlu0 %301, %v177
        %v303 = vpop.permute.xlu0 %302
        %304 = vset.pattern.permute.xlu0 2
        %305 = vperm.xlu0 %304, %v178
        %v306 = vpop.permute.xlu0 %305
        %307 = vset.pattern.permute.xlu0 2
        %308 = vperm.xlu0 %307, %v179
        %v309 = vpop.permute.xlu0 %308
        %310 = vset.pattern.permute.xlu0 2
        %311 = vperm.xlu0 %310, %v180
        %v312 = vpop.permute.xlu0 %311
        %313 = vset.pattern.permute.xlu0 2
        %314 = vperm.xlu0 %313, %v181
        %v315 = vpop.permute.xlu0 %314
        %316 = vset.pattern.permute.xlu0 2
        %317 = vperm.xlu0 %316, %v182
        %v318 = vpop.permute.xlu0 %317
        %vm319 = vcmp.eq.s32.totalorder %v297, %v174
        %vm320 = vcmp.eq.s32.totalorder %v300, %v174
        %vm321 = vcmp.eq.s32.totalorder %v303, %v174
        %vm322 = vcmp.eq.s32.totalorder %v306, %v174
        %vm323 = vcmp.eq.s32.totalorder %v309, %v174
        %vm324 = vcmp.eq.s32.totalorder %v312, %v174
        %vm325 = vcmp.eq.s32.totalorder %v315, %v174
        %vm326 = vcmp.eq.s32.totalorder %v318, %v174
        %v327 = vsel %vm319, 1, 0
        %v328 = vsel %vm320, 1, 0
        %v329 = vsel %vm321, 1, 0
        %v330 = vsel %vm322, 1, 0
        %v331 = vsel %vm323, 1, 0
        %v332 = vsel %vm324, 1, 0
        %v333 = vsel %vm325, 1, 0
        %v334 = vsel %vm326, 1, 0
        %v335 = vcvt.s32.f32 %v327
        %v336 = vcvt.s32.f32 %v328
        %v337 = vcvt.s32.f32 %v329
        %v338 = vcvt.s32.f32 %v330
        %v339 = vcvt.s32.f32 %v331
        %v340 = vcvt.s32.f32 %v332
        %v341 = vcvt.s32.f32 %v333
        %v342 = vcvt.s32.f32 %v334
        %v343 = vadd.f32 %v287, %v335
        %v344 = vadd.f32 %v288, %v336
        %v345 = vadd.f32 %v289, %v337
        %v346 = vadd.f32 %v290, %v338
        %v347 = vadd.f32 %v291, %v339
        %v348 = vadd.f32 %v292, %v340
        %v349 = vadd.f32 %v293, %v341
        %v350 = vadd.f32 %v294, %v342
        %351 = vset.pattern.permute.xlu0 3
        %352 = vperm.xlu0 %351, %v175
        %v353 = vpop.permute.xlu0 %352
        %354 = vset.pattern.permute.xlu0 3
        %355 = vperm.xlu0 %354, %v176
        %v356 = vpop.permute.xlu0 %355
        %357 = vset.pattern.permute.xlu0 3
        %358 = vperm.xlu0 %357, %v177
        %v359 = vpop.permute.xlu0 %358
        %360 = vset.pattern.permute.xlu0 3
        %361 = vperm.xlu0 %360, %v178
        %v362 = vpop.permute.xlu0 %361
        %363 = vset.pattern.permute.xlu0 3
        %364 = vperm.xlu0 %363, %v179
        %v365 = vpop.permute.xlu0 %364
        %366 = vset.pattern.permute.xlu0 3
        %367 = vperm.xlu0 %366, %v180
        %v368 = vpop.permute.xlu0 %367
        %369 = vset.pattern.permute.xlu0 3
        %370 = vperm.xlu0 %369, %v181
        %v371 = vpop.permute.xlu0 %370
        %372 = vset.pattern.permute.xlu0 3
        %373 = vperm.xlu0 %372, %v182
        %v374 = vpop.permute.xlu0 %373
        %vm375 = vcmp.eq.s32.totalorder %v353, %v174
        %vm376 = vcmp.eq.s32.totalorder %v356, %v174
        %vm377 = vcmp.eq.s32.totalorder %v359, %v174
        %vm378 = vcmp.eq.s32.totalorder %v362, %v174
        %vm379 = vcmp.eq.s32.totalorder %v365, %v174
        %vm380 = vcmp.eq.s32.totalorder %v368, %v174
        %vm381 = vcmp.eq.s32.totalorder %v371, %v174
        %vm382 = vcmp.eq.s32.totalorder %v374, %v174
        %v383 = vsel %vm375, 1, 0
        %v384 = vsel %vm376, 1, 0
        %v385 = vsel %vm377, 1, 0
        %v386 = vsel %vm378, 1, 0
        %v387 = vsel %vm379, 1, 0
        %v388 = vsel %vm380, 1, 0
        %v389 = vsel %vm381, 1, 0
        %v390 = vsel %vm382, 1, 0
        %v391 = vcvt.s32.f32 %v383
        %v392 = vcvt.s32.f32 %v384
        %v393 = vcvt.s32.f32 %v385
        %v394 = vcvt.s32.f32 %v386
        %v395 = vcvt.s32.f32 %v387
        %v396 = vcvt.s32.f32 %v388
        %v397 = vcvt.s32.f32 %v389
        %v398 = vcvt.s32.f32 %v390
        %v399 = vadd.f32 %v343, %v391
        %v400 = vadd.f32 %v344, %v392
        %v401 = vadd.f32 %v345, %v393
        %v402 = vadd.f32 %v346, %v394
        %v403 = vadd.f32 %v347, %v395
        %v404 = vadd.f32 %v348, %v396
        %v405 = vadd.f32 %v349, %v397
        %v406 = vadd.f32 %v350, %v398
        %407 = vset.pattern.permute.xlu0 4
        %408 = vperm.xlu0 %407, %v175
        %v409 = vpop.permute.xlu0 %408
        %410 = vset.pattern.permute.xlu0 4
        %411 = vperm.xlu0 %410, %v176
        %v412 = vpop.permute.xlu0 %411
        %413 = vset.pattern.permute.xlu0 4
        %414 = vperm.xlu0 %413, %v177
        %v415 = vpop.permute.xlu0 %414
        %416 = vset.pattern.permute.xlu0 4
        %417 = vperm.xlu0 %416, %v178
        %v418 = vpop.permute.xlu0 %417
        %419 = vset.pattern.permute.xlu0 4
        %420 = vperm.xlu0 %419, %v179
        %v421 = vpop.permute.xlu0 %420
        %422 = vset.pattern.permute.xlu0 4
        %423 = vperm.xlu0 %422, %v180
        %v424 = vpop.permute.xlu0 %423
        %425 = vset.pattern.permute.xlu0 4
        %426 = vperm.xlu0 %425, %v181
        %v427 = vpop.permute.xlu0 %426
        %428 = vset.pattern.permute.xlu0 4
        %429 = vperm.xlu0 %428, %v182
        %v430 = vpop.permute.xlu0 %429
        %vm431 = vcmp.eq.s32.totalorder %v409, %v174
        %vm432 = vcmp.eq.s32.totalorder %v412, %v174
        %vm433 = vcmp.eq.s32.totalorder %v415, %v174
        %vm434 = vcmp.eq.s32.totalorder %v418, %v174
        %vm435 = vcmp.eq.s32.totalorder %v421, %v174
        %vm436 = vcmp.eq.s32.totalorder %v424, %v174
        %vm437 = vcmp.eq.s32.totalorder %v427, %v174
        %vm438 = vcmp.eq.s32.totalorder %v430, %v174
        %v439 = vsel %vm431, 1, 0
        %v440 = vsel %vm432, 1, 0
        %v441 = vsel %vm433, 1, 0
        %v442 = vsel %vm434, 1, 0
        %v443 = vsel %vm435, 1, 0
        %v444 = vsel %vm436, 1, 0
        %v445 = vsel %vm437, 1, 0
        %v446 = vsel %vm438, 1, 0
        %v447 = vcvt.s32.f32 %v439
        %v448 = vcvt.s32.f32 %v440
        %v449 = vcvt.s32.f32 %v441
        %v450 = vcvt.s32.f32 %v442
        %v451 = vcvt.s32.f32 %v443
        %v452 = vcvt.s32.f32 %v444
        %v453 = vcvt.s32.f32 %v445
        %v454 = vcvt.s32.f32 %v446
        %v455 = vadd.f32 %v399, %v447
        %v456 = vadd.f32 %v400, %v448
        %v457 = vadd.f32 %v401, %v449
        %v458 = vadd.f32 %v402, %v450
        %v459 = vadd.f32 %v403, %v451
        %v460 = vadd.f32 %v404, %v452
        %v461 = vadd.f32 %v405, %v453
        %v462 = vadd.f32 %v406, %v454
        %463 = vset.pattern.permute.xlu0 5
        %464 = vperm.xlu0 %463, %v175
        %v465 = vpop.permute.xlu0 %464
        %466 = vset.pattern.permute.xlu0 5
        %467 = vperm.xlu0 %466, %v176
        %v468 = vpop.permute.xlu0 %467
        %469 = vset.pattern.permute.xlu0 5
        %470 = vperm.xlu0 %469, %v177
        %v471 = vpop.permute.xlu0 %470
        %472 = vset.pattern.permute.xlu0 5
        %473 = vperm.xlu0 %472, %v178
        %v474 = vpop.permute.xlu0 %473
        %475 = vset.pattern.permute.xlu0 5
        %476 = vperm.xlu0 %475, %v179
        %v477 = vpop.permute.xlu0 %476
        %478 = vset.pattern.permute.xlu0 5
        %479 = vperm.xlu0 %478, %v180
        %v480 = vpop.permute.xlu0 %479
        %481 = vset.pattern.permute.xlu0 5
        %482 = vperm.xlu0 %481, %v181
        %v483 = vpop.permute.xlu0 %482
        %484 = vset.pattern.permute.xlu0 5
        %485 = vperm.xlu0 %484, %v182
        %v486 = vpop.permute.xlu0 %485
        %vm487 = vcmp.eq.s32.totalorder %v465, %v174
        %vm488 = vcmp.eq.s32.totalorder %v468, %v174
        %vm489 = vcmp.eq.s32.totalorder %v471, %v174
        %vm490 = vcmp.eq.s32.totalorder %v474, %v174
        %vm491 = vcmp.eq.s32.totalorder %v477, %v174
        %vm492 = vcmp.eq.s32.totalorder %v480, %v174
        %vm493 = vcmp.eq.s32.totalorder %v483, %v174
        %vm494 = vcmp.eq.s32.totalorder %v486, %v174
        %v495 = vsel %vm487, 1, 0
        %v496 = vsel %vm488, 1, 0
        %v497 = vsel %vm489, 1, 0
        %v498 = vsel %vm490, 1, 0
        %v499 = vsel %vm491, 1, 0
        %v500 = vsel %vm492, 1, 0
        %v501 = vsel %vm493, 1, 0
        %v502 = vsel %vm494, 1, 0
        %v503 = vcvt.s32.f32 %v495
        %v504 = vcvt.s32.f32 %v496
        %v505 = vcvt.s32.f32 %v497
        %v506 = vcvt.s32.f32 %v498
        %v507 = vcvt.s32.f32 %v499
        %v508 = vcvt.s32.f32 %v500
        %v509 = vcvt.s32.f32 %v501
        %v510 = vcvt.s32.f32 %v502
        %v511 = vadd.f32 %v455, %v503
        %v512 = vadd.f32 %v456, %v504
        %v513 = vadd.f32 %v457, %v505
        %v514 = vadd.f32 %v458, %v506
        %v515 = vadd.f32 %v459, %v507
        %v516 = vadd.f32 %v460, %v508
        %v517 = vadd.f32 %v461, %v509
        %v518 = vadd.f32 %v462, %v510
        %519 = vset.pattern.permute.xlu0 6
        %520 = vperm.xlu0 %519, %v175
        %v521 = vpop.permute.xlu0 %520
        %522 = vset.pattern.permute.xlu0 6
        %523 = vperm.xlu0 %522, %v176
        %v524 = vpop.permute.xlu0 %523
        %525 = vset.pattern.permute.xlu0 6
        %526 = vperm.xlu0 %525, %v177
        %v527 = vpop.permute.xlu0 %526
        %528 = vset.pattern.permute.xlu0 6
        %529 = vperm.xlu0 %528, %v178
        %v530 = vpop.permute.xlu0 %529
        %531 = vset.pattern.permute.xlu0 6
        %532 = vperm.xlu0 %531, %v179
        %v533 = vpop.permute.xlu0 %532
        %534 = vset.pattern.permute.xlu0 6
        %535 = vperm.xlu0 %534, %v180
        %v536 = vpop.permute.xlu0 %535
        %537 = vset.pattern.permute.xlu0 6
        %538 = vperm.xlu0 %537, %v181
        %v539 = vpop.permute.xlu0 %538
        %540 = vset.pattern.permute.xlu0 6
        %541 = vperm.xlu0 %540, %v182
        %v542 = vpop.permute.xlu0 %541
        %vm543 = vcmp.eq.s32.totalorder %v521, %v174
        %vm544 = vcmp.eq.s32.totalorder %v524, %v174
        %vm545 = vcmp.eq.s32.totalorder %v527, %v174
        %vm546 = vcmp.eq.s32.totalorder %v530, %v174
        %vm547 = vcmp.eq.s32.totalorder %v533, %v174
        %vm548 = vcmp.eq.s32.totalorder %v536, %v174
        %vm549 = vcmp.eq.s32.totalorder %v539, %v174
        %vm550 = vcmp.eq.s32.totalorder %v542, %v174
        %v551 = vsel %vm543, 1, 0
        %v552 = vsel %vm544, 1, 0
        %v553 = vsel %vm545, 1, 0
        %v554 = vsel %vm546, 1, 0
        %v555 = vsel %vm547, 1, 0
        %v556 = vsel %vm548, 1, 0
        %v557 = vsel %vm549, 1, 0
        %v558 = vsel %vm550, 1, 0
        %v559 = vcvt.s32.f32 %v551
        %v560 = vcvt.s32.f32 %v552
        %v561 = vcvt.s32.f32 %v553
        %v562 = vcvt.s32.f32 %v554
        %v563 = vcvt.s32.f32 %v555
        %v564 = vcvt.s32.f32 %v556
        %v565 = vcvt.s32.f32 %v557
        %v566 = vcvt.s32.f32 %v558
        %v567 = vadd.f32 %v511, %v559
        %v568 = vadd.f32 %v512, %v560
        %v569 = vadd.f32 %v513, %v561
        %v570 = vadd.f32 %v514, %v562
        %v571 = vadd.f32 %v515, %v563
        %v572 = vadd.f32 %v516, %v564
        %v573 = vadd.f32 %v517, %v565
        %v574 = vadd.f32 %v518, %v566
        %575 = vset.pattern.permute.xlu0 7
        %576 = vperm.xlu0 %575, %v175
        %v577 = vpop.permute.xlu0 %576
        %578 = vset.pattern.permute.xlu0 7
        %579 = vperm.xlu0 %578, %v176
        %v580 = vpop.permute.xlu0 %579
        %581 = vset.pattern.permute.xlu0 7
        %582 = vperm.xlu0 %581, %v177
        %v583 = vpop.permute.xlu0 %582
        %584 = vset.pattern.permute.xlu0 7
        %585 = vperm.xlu0 %584, %v178
        %v586 = vpop.permute.xlu0 %585
        %587 = vset.pattern.permute.xlu0 7
        %588 = vperm.xlu0 %587, %v179
        %v589 = vpop.permute.xlu0 %588
        %590 = vset.pattern.permute.xlu0 7
        %591 = vperm.xlu0 %590, %v180
        %v592 = vpop.permute.xlu0 %591
        %593 = vset.pattern.permute.xlu0 7
        %594 = vperm.xlu0 %593, %v181
        %v595 = vpop.permute.xlu0 %594
        %596 = vset.pattern.permute.xlu0 7
        %597 = vperm.xlu0 %596, %v182
        %v598 = vpop.permute.xlu0 %597
        %vm599 = vcmp.eq.s32.totalorder %v577, %v174
        %vm600 = vcmp.eq.s32.totalorder %v580, %v174
        %vm601 = vcmp.eq.s32.totalorder %v583, %v174
        %vm602 = vcmp.eq.s32.totalorder %v586, %v174
        %vm603 = vcmp.eq.s32.totalorder %v589, %v174
        %vm604 = vcmp.eq.s32.totalorder %v592, %v174
        %vm605 = vcmp.eq.s32.totalorder %v595, %v174
        %vm606 = vcmp.eq.s32.totalorder %v598, %v174
        %v607 = vsel %vm599, 1, 0
        %v608 = vsel %vm600, 1, 0
        %v609 = vsel %vm601, 1, 0
        %v610 = vsel %vm602, 1, 0
        %v611 = vsel %vm603, 1, 0
        %v612 = vsel %vm604, 1, 0
        %v613 = vsel %vm605, 1, 0
        %v614 = vsel %vm606, 1, 0
        %v615 = vcvt.s32.f32 %v607
        %v616 = vcvt.s32.f32 %v608
        %v617 = vcvt.s32.f32 %v609
        %v618 = vcvt.s32.f32 %v610
        %v619 = vcvt.s32.f32 %v611
        %v620 = vcvt.s32.f32 %v612
        %v621 = vcvt.s32.f32 %v613
        %v622 = vcvt.s32.f32 %v614
        %v623 = vadd.f32 %v567, %v615
        %v624 = vadd.f32 %v568, %v616
        %v625 = vadd.f32 %v569, %v617
        %v626 = vadd.f32 %v570, %v618
        %v627 = vadd.f32 %v571, %v619
        %v628 = vadd.f32 %v572, %v620
        %v629 = vadd.f32 %v573, %v621
        %v630 = vadd.f32 %v574, %v622
        %v631 = vpack.c.bf16 %v624, %v623
        %v632 = vpack.c.bf16 %v626, %v625
        %v633 = vpack.c.bf16 %v628, %v627
        %v634 = vpack.c.bf16 %v630, %v629
        %v635 = vld [vmem:[%s1] sm:$0xf]
        %v636 = vld [vmem:[%s1 + $0x4] sm:$0xf]
        %v637 = vld [vmem:[%s1 + $0x8] sm:$0xf]
        %v638 = vld [vmem:[%s1 + $0xc] sm:$0xf]
        %v639 = vld [vmem:[%s1 + $0x10] sm:$0xf]
        %v640 = vld [vmem:[%s1 + $0x14] sm:$0xf]
        %v641 = vld [vmem:[%s1 + $0x18] sm:$0xf]
        %v642 = vld [vmem:[%s1 + $0x1c] sm:$0xf]
        %v643 = vld [vmem:[%s1 + $0x20] sm:$0xf]
        %v644 = vld [vmem:[%s1 + $0x24] sm:$0xf]
        %v645 = vld [vmem:[%s1 + $0x28] sm:$0xf]
        %v646 = vld [vmem:[%s1 + $0x2c] sm:$0xf]
        %v647 = vld [vmem:[%s1 + $0x30] sm:$0xf]
        %v648 = vld [vmem:[%s1 + $0x34] sm:$0xf]
        %v649 = vld [vmem:[%s1 + $0x38] sm:$0xf]
        %v650 = vld [vmem:[%s1 + $0x3c] sm:$0xf]
        %v651 = vld [vmem:[%s2] sm:$0x1]
        %v653 = vlaneseq
        %v654 = vshrl.u32 %v653, 7
        %v655 = vsub.s32 0, %v654
        %v656 = vrot.slane %v651, %v655
        %v674 = vunpack.c.l.b16 %v635
        %v675 = vunpack.c.l.b16 %v636
        %v676 = vunpack.c.l.b16 %v637
        %v677 = vunpack.c.l.b16 %v638
        %v678 = vunpack.c.l.b16 %v639
        %v679 = vunpack.c.l.b16 %v640
        %v680 = vunpack.c.l.b16 %v641
        %v681 = vunpack.c.l.b16 %v642
        %v682 = vunpack.c.l.b16 %v643
        %v683 = vunpack.c.l.b16 %v644
        %v684 = vunpack.c.l.b16 %v645
        %v685 = vunpack.c.l.b16 %v646
        %v686 = vunpack.c.l.b16 %v647
        %v687 = vunpack.c.l.b16 %v648
        %v688 = vunpack.c.l.b16 %v649
        %v689 = vunpack.c.l.b16 %v650
        %v690 = vpack.c.b16 %v675, %v674
        %v691 = vpack.c.b16 %v677, %v676
        %v692 = vpack.c.b16 %v679, %v678
        %v693 = vpack.c.b16 %v681, %v680
        %v694 = vpack.c.b16 %v683, %v682
        %v695 = vpack.c.b16 %v685, %v684
        %v696 = vpack.c.b16 %v687, %v686
        %v697 = vpack.c.b16 %v689, %v688
        %706 = vmatprep.subr.bf16.mxu0 0
        %707 = vmatpush1.bf16.msra.mxu0 %v690
        %708 = vmatprep.subr.bf16.mxu0 0
        %709 = vmatpush1.bf16.msra.mxu0 %v691
        %710 = vmatprep.subr.bf16.mxu0 0
        %711 = vmatpush1.bf16.msra.mxu0 %v692
        %712 = vmatprep.subr.bf16.mxu0 0
        %713 = vmatpush1.bf16.msra.mxu0 %v693
        %714 = vmatprep.subr.bf16.mxu0 0
        %715 = vmatpush1.bf16.msra.mxu0 %v694
        %716 = vmatprep.subr.bf16.mxu0 0
        %717 = vmatpush1.bf16.msra.mxu0 %v695
        %718 = vmatprep.subr.bf16.mxu0 0
        %719 = vmatpush1.bf16.msra.mxu0 %v696
        %720 = vmatprep.subr.bf16.mxu0 0
        %721 = vmatpush1.bf16.msra.mxu0 %v697
        %722 = vmatprep.subr.bf16.mxu0 0
        %723 = vmatpush1.bf16.msra.mxu0 0
        %724 = vmatprep.subr.bf16.mxu0 0
        %725 = vmatpush1.bf16.msra.mxu0 0
        %726 = vmatprep.subr.bf16.mxu0 0
        %727 = vmatpush1.bf16.msra.mxu0 0
        %728 = vmatprep.subr.bf16.mxu0 0
        %729 = vmatpush1.bf16.msra.mxu0 0
        %730 = vmatprep.subr.bf16.mxu0 0
        %731 = vmatpush1.bf16.msra.mxu0 0
        %732 = vmatprep.subr.bf16.mxu0 0
        %733 = vmatpush1.bf16.msra.mxu0 0
        %734 = vmatprep.subr.bf16.mxu0 0
        %735 = vmatpush1.bf16.msra.mxu0 0
        %736 = vmatprep.subr.bf16.mxu0 0
        %737 = vmatpush1.bf16.msra.mxu0 0
        %738 = vmatprep.mubr.bf16.mxu0 0
        %739 = vmatmul.mubr.bf16.gmra.mrb[0].mxu0 %v631
        %v740 = vpop.f32.mrb[0].mxu0
        %v741 = vadd.f32 %v656, %v740
        %v742 = vpop.f32.mrb[0].mxu0
        %v743 = vpop.f32.mrb[0].mxu0
        %v744 = vadd.f32 %v656, %v743
        %v745 = vpop.f32.mrb[0].mxu0
        %746 = vmatprep.mubr.bf16.mxu0 0
        %747 = vmatmul.mubr.bf16.gmra.mrb[0].mxu0 %v632
        %v748 = vpop.f32.mrb[0].mxu0
        %v749 = vadd.f32 %v656, %v748
        %v750 = vpop.f32.mrb[0].mxu0
        %v751 = vpop.f32.mrb[0].mxu0
        %v752 = vadd.f32 %v656, %v751
        %v753 = vpop.f32.mrb[0].mxu0
        %754 = vmatprep.mubr.bf16.mxu0 0
        %755 = vmatmul.mubr.bf16.gmra.mrb[0].mxu0 %v633
        %v756 = vpop.f32.mrb[0].mxu0
        %v757 = vadd.f32 %v656, %v756
        %v758 = vpop.f32.mrb[0].mxu0
        %v759 = vpop.f32.mrb[0].mxu0
        %v760 = vadd.f32 %v656, %v759
        %v761 = vpop.f32.mrb[0].mxu0
        %762 = vmatprep.mubr.bf16.mxu0 0
        %763 = vmatmul.mubr.bf16.gmra.mrb[0].mxu0 %v634
        %v764 = vpop.f32.mrb[0].mxu0
        %v765 = vadd.f32 %v656, %v764
        %v766 = vpop.f32.mrb[0].mxu0
        %v767 = vpop.f32.mrb[0].mxu0
        %v768 = vadd.f32 %v656, %v767
        %v769 = vpop.f32.mrb[0].mxu0
        %770 = vdwg.mxu0
        %v771 = vtanh.pop %v741
        %v772 = vtanh.pop %v744
        %v773 = vtanh.pop %v749
        %v774 = vtanh.pop %v752
        %v775 = vtanh.pop %v757
        %v776 = vtanh.pop %v760
        %v777 = vtanh.pop %v765
        %v778 = vtanh.pop %v768
        %779 = vst [vmem:[%s164] sm:$0xff] %v771
        %780 = vst [vmem:[%s164 + $0x8] sm:$0xff] %v772
        %781 = vst [vmem:[%s164 + $0x10] sm:$0xff] %v773
        %782 = vst [vmem:[%s164 + $0x18] sm:$0xff] %v774
        %783 = vst [vmem:[%s164 + $0x20] sm:$0xff] %v775
        %784 = vst [vmem:[%s164 + $0x28] sm:$0xff] %v776
        %785 = vst [vmem:[%s164 + $0x30] sm:$0xff] %v777
        %786 = vst [vmem:[%s164 + $0x38] sm:$0xff] %v778
        %s787 = sand.u32 %s93, 1
        %s788 = scalar_lea.sflag [#allocation3], %s787
        %s789 = sand.u32 %s93, 1
        %s790 = smul.addr %s789, 64
        %s791 = scalar_lea.vmem [#allocation2], %s790
        // Predicated region
        $region33: #{tpu_custom_call.1} parent=31 // pred_check
          %p792 = pneg %p103
        $region34: #{tpu_custom_call.1} parent=31 // pred_check_branch
          %794 = sbr.rel (%p792) target = $region36
        $region35: #{tpu_custom_call.1} parent=31 // pred_region
          %s795 = smul.u32 8, %s17
          %s797 = ssub.s32 1024, 1024
          %798 = vsyncadd %s788, %s797
          %s799 = smul.addr %s795, 128
          %s800 = scalar_lea.hbm %s3, %s799
          %s801 = sshll.u32 %s791, 4
          %s802 = int_to_ptr.vmem [resolvable:$true] %s801
          %807 = dma.vmem_to_hbm [thread:$0]  %s802, 1024, %s800, %s788, 128, 128, 8
        $region36: #{tpu_custom_call.1} parent=31 // pred_fallthru
          _
      $region32: #{tpu_custom_call.1} parent=5 // pred_fallthru
        _
      %p808 = scmp.le.s32.totalorder 2, %s12
      // Predicated region
      $region37: #{tpu_custom_call.1} parent=5 // pred_check
        %p809 = pneg %p808
      $region38: #{tpu_custom_call.1} parent=5 // pred_check_branch
        %811 = sbr.rel (%p809) target = $region40
      $region39: #{tpu_custom_call.1} parent=5 // pred_region
        %s812 = ssub.s32 %s12, 2
        // Predicated region
        $region41: #{tpu_custom_call.1} parent=39 // pred_check
          %p813 = pneg %p109
        $region42: #{tpu_custom_call.1} parent=39 // pred_check_branch
          %815 = sbr.rel (%p813) target = $region44
        $region43: #{tpu_custom_call.1} parent=39 // pred_region
          %s816 = sand.u32 %s94, 1
          %s817 = scalar_lea.sflag [#allocation3], %s816
          %s818 = sand.u32 %s94, 1
          %s819 = smul.addr %s818, 64
          %s820 = scalar_lea.vmem [#allocation2], %s819
          %821 = dma.done %s817, 1024
        $region44: #{tpu_custom_call.1} parent=39 // pred_fallthru
          _
      $region40: #{tpu_custom_call.1} parent=5 // pred_fallthru
        _
    $region6: #{tpu_custom_call.1} parent=1 // loop_footer
      %s16 = sadd.s32 1, %s12
    $region7: #{tpu_custom_call.1} parent=1 // loop_footer_branch
      %11 = sbr.rel target = $region3
    $region8: #{tpu_custom_call.1} parent=1 // loop_exit
      _
    %822 = vsyncpa [#allocation3], 1
    %s823 = scalar_lea.sflag [#allocation3], 1
    %824 = vsyncpa %s823, 1

</llo_original>
